<compile_context>
chip_gen: v7x
topology: tpu7x:2x2x1
jax: 0.10.0
libtpu: 0.0.40
codegen_flags: <defaults>
</compile_context>

<pallas_src>
import math

import jax
import jax.numpy as jnp
from jax import lax
from jax.experimental import pallas as pl
from jax.experimental.pallas import tpu as pltpu

LANE = 128


def _make_dice_count_kernel(num_classes, ts, cs, n_total, needs_mask):
    """Per-(batch, spatial-tile) kernel accumulating per-class lane counts."""
    num_fg = num_classes - 1
    n_full_chunks = ts // cs
    rem_rows = ts % cs

    def kernel(logits_ref, labels_ref, inter_ref, union_ref):
        t = pl.program_id(1)

        @pl.when(t == 0)
        def _init():
            inter_ref[...] = jnp.zeros(inter_ref.shape, inter_ref.dtype)
            union_ref[...] = jnp.zeros(union_ref.shape, union_ref.dtype)

        tile_row0 = t * ts  # global sublane-row offset of this tile

        def process_chunk(row_start, rows, carry):
            inter_rows, union_rows = carry
            tgt = labels_ref[pl.ds(row_start, rows), :]            # (rows,128) i32

            # Running argmax over the small static channel axis; each channel
            # chunk is loaded on demand so vreg live ranges stay bounded.
            # Strict '>' gives first-max tie-breaking (matches jnp.argmax).
            best_val = logits_ref[0, pl.ds(row_start, rows), :]
            best_idx = jnp.zeros((rows, LANE), jnp.int32)
            for ch in range(1, num_classes):
                v = logits_ref[ch, pl.ds(row_start, rows), :]
                take = v > best_val
                best_val = jnp.where(take, v, best_val)
                best_idx = jnp.where(take, jnp.int32(ch), best_idx)

            if needs_mask:
                # Ragged tail: out-of-range elements become background so they
                # contribute to no foreground class.
                r_iota = lax.broadcasted_iota(jnp.int32, (rows, LANE), 0)
                l_iota = lax.broadcasted_iota(jnp.int32, (rows, LANE), 1)
                flat = (tile_row0 + row_start + r_iota) * LANE + l_iota
                valid = flat < n_total
                best_idx = jnp.where(valid, best_idx, 0)
                tgt = jnp.where(valid, tgt, 0)

            new_i = []
            new_u = []
            for c in range(1, num_classes):           # Python-constant class ids
                p = best_idx == c
                tm = tgt == c
                i_cnt = jnp.sum((p & tm).astype(jnp.int32), axis=0, keepdims=True)
                u_cnt = jnp.sum((p | tm).astype(jnp.int32), axis=0, keepdims=True)
                new_i.append(inter_rows[c - 1] + i_cnt)
                new_u.append(union_rows[c - 1] + u_cnt)
            return tuple(new_i), tuple(new_u)

        zero = jnp.zeros((1, LANE), jnp.int32)
        carry = (tuple(zero for _ in range(num_fg)),
                 tuple(zero for _ in range(num_fg)))

        if n_full_chunks > 0:
            def body(i, c):
                start = pl.multiple_of(i * cs, cs)
                return process_chunk(start, cs, c)
            carry = lax.fori_loop(0, n_full_chunks, body, carry)
        if rem_rows > 0:
            carry = process_chunk(n_full_chunks * cs, rem_rows, carry)

        inter_rows, union_rows = carry
        for c in range(1, num_classes):
            row = pl.ds(c - 1, 1)
            inter_ref[row, :] = inter_ref[row, :] + inter_rows[c - 1]
            union_ref[row, :] = union_ref[row, :] + union_rows[c - 1]

    return kernel


def dice_loss(logits, target, eps=1e-8):
    """Pallas implementation of DiceLoss11.forward.

    logits: [B, C, *spatial] float array (class scores).
    target: [B, *spatial] integer labels in [0, C).
    Returns a float32 scalar loss.
    """
    B = logits.shape[0]
    C = logits.shape[1]
    if C < 2:
        raise ValueError("DiceLoss11 needs at least 2 classes")
    n = int(math.prod(logits.shape[2:]))

    x = logits.reshape(B, C, n)
    y = target.reshape(B, n)
    if y.dtype != jnp.int32:
        y = y.astype(jnp.int32)

    # Fold the flattened spatial axis into (rows, 128): free reshape when
    # n % 128 == 0; otherwise a minimal pad to the next lane multiple (the
    # kernel masks the tail by global index, so pad values never matter).
    n_lane = ((n + LANE - 1) // LANE) * LANE
    if n_lane != n:
        x = jnp.pad(x, ((0, 0), (0, 0), (0, n_lane - n)))
        y = jnp.pad(y, ((0, 0), (0, n_lane - n)))
    rows = n_lane // LANE
    x = x.reshape(B, C, rows, LANE)
    y = y.reshape(B, rows, LANE)

    # Tile sizing: as many sublane rows per grid step as a ~10 MiB
    # double-buffered input budget allows; chunk loop handles vreg pressure.
    cs = 32
    esize = int(x.dtype.itemsize)
    bytes_per_row = LANE * (C * esize + 4)            # logits + labels per row
    budget = 10 * 1024 * 1024
    ts_cap = min(2048, max(8, budget // (2 * bytes_per_row)))
    if rows <= ts_cap:
        ts = rows                                     # full extent: any size OK
    else:
        ts = max(8, (ts_cap // cs) * cs)              # multiple of 8 sublanes
    nt = -(-rows // ts)
    needs_mask = (nt * ts * LANE) != n

    kernel = _make_dice_count_kernel(C, ts, cs, n, needs_mask)

    flops = int(B * n * (11 * (C - 1) + 3))
    bytes_accessed = int(B * n * (C * esize + 4) + 2 * B * (C - 1) * LANE * 4)

    inter, union = pl.pallas_call(
        kernel,
        out_shape=(
            jax.ShapeDtypeStruct((B, C - 1, LANE), jnp.int32),
            jax.ShapeDtypeStruct((B, C - 1, LANE), jnp.int32),
        ),
        grid_spec=pltpu.PrefetchScalarGridSpec(
            num_scalar_prefetch=0,
            grid=(B, nt),
            in_specs=[
                pl.BlockSpec((None, C, ts, LANE), lambda b, t: (b, 0, t, 0)),
                pl.BlockSpec((None, ts, LANE), lambda b, t: (b, t, 0)),
            ],
            out_specs=[
                pl.BlockSpec((None, C - 1, LANE), lambda b, t: (b, 0, 0)),
                pl.BlockSpec((None, C - 1, LANE), lambda b, t: (b, 0, 0)),
            ],
        ),
        compiler_params=pltpu.CompilerParams(
            dimension_semantics=("parallel", "arbitrary"),
            vmem_limit_bytes=32 * 1024 * 1024,
        ),
        cost_estimate=pl.CostEstimate(
            flops=flops, transcendentals=0, bytes_accessed=bytes_accessed),
    )(x, y)

    # Tiny scalar glue: exact int32 lane sums -> eps-smoothed dice -> mean.
    inter_f = jnp.sum(inter, axis=-1).astype(jnp.float32)    # (B, C-1)
    union_f = jnp.sum(union, axis=-1).astype(jnp.float32)
    dice = (inter_f + eps) / (union_f + eps)
    return (1.0 - jnp.mean(dice)).astype(jnp.float32)


def _reference(logits, target, eps=1e-8):
    B, C = logits.shape[0], logits.shape[1]
    pred = jnp.argmax(logits, axis=1).reshape(B, -1)
    tgt = target.reshape(B, -1)
    cols = []
    for c in range(1, C):
        p = pred == c
        t = tgt == c
        inter = jnp.sum(p & t, axis=1).astype(jnp.float32)
        uni = jnp.sum(p | t, axis=1).astype(jnp.float32)
        cols.append((inter + eps) / (uni + eps))
    dice = jnp.stack(cols, axis=1)
    return 1.0 - jnp.mean(dice)


if __name__ == "__main__":
    key = jax.random.PRNGKey(0)
    k1, k2 = jax.random.split(key)
    B, C, H, W = 2, 4, 16, 16
    logits = jax.random.normal(k1, (B, C, H, W), dtype=jnp.float32)
    target = jax.random.randint(k2, (B, H, W), 0, C, dtype=jnp.int32)

    out = jax.block_until_ready(dice_loss(logits, target))
    ref = jax.block_until_ready(_reference(logits, target))

    assert jnp.allclose(out, ref, rtol=1e-5, atol=1e-6), (out, ref)
    print("KERNEL_OK")
</pallas_src>

<mosaic_0001>
module attributes {stable_mosaic.version = 11 : i64} {
  func.func @kernel(%arg0: i32, %arg1: i32, %arg2: memref<1x4x2x128xf32, #tpu.memory_space<vmem>>, %arg3: memref<1x2x128xi32, #tpu.memory_space<vmem>>, %arg4: memref<1x3x128xi32, #tpu.memory_space<vmem>>, %arg5: memref<1x3x128xi32, #tpu.memory_space<vmem>>) attributes {dimension_semantics = [#tpu.dimension_semantics<parallel>, #tpu.dimension_semantics<arbitrary>], iteration_bounds = array<i64: 2, 1>, scalar_prefetch = 0 : i64, scratch_operands = 0 : i64, tpu.core_type = #tpu.core_type<tc>, window_params = [{transform_indices = @transform_0, window_bounds = array<i64: 1, 4, 2, 128>}, {transform_indices = @transform_1, window_bounds = array<i64: 1, 2, 128>}, {transform_indices = @transform_2, window_bounds = array<i64: 1, 3, 128>}, {transform_indices = @transform_3, window_bounds = array<i64: 1, 3, 128>}]} {
    %c0_i32 = arith.constant 0 : i32
    %0 = arith.cmpi eq, %arg1, %c0_i32 : i32
    %1 = arith.extui %0 : i1 to i32
    %c0_i32_0 = arith.constant 0 : i32
    %2 = arith.cmpi ne, %1, %c0_i32_0 : i32
    scf.if %2 {
      %c0_i32_65 = arith.constant 0 : i32
      %104 = vector.broadcast %c0_i32_65 : i32 to vector<3x128xi32>
      %c0_66 = arith.constant 0 : index
      %c0_67 = arith.constant 0 : index
      %c0_68 = arith.constant 0 : index
      %105 = vector.load %arg4[%c0_66, %c0_67, %c0_68] : memref<1x3x128xi32, #tpu.memory_space<vmem>>, vector<1x3x128xi32>
      %106 = vector.shape_cast %105 : vector<1x3x128xi32> to vector<3x128xi32>
      %107 = vector.shape_cast %104 : vector<3x128xi32> to vector<1x3x128xi32>
      tpu.vector_store %arg4[%c0_66, %c0_67, %c0_68], %107 {strides = array<i32>} : memref<1x3x128xi32, #tpu.memory_space<vmem>>, vector<1x3x128xi32>,
      %c0_i32_69 = arith.constant 0 : i32
      %108 = vector.broadcast %c0_i32_69 : i32 to vector<3x128xi32>
      %c0_70 = arith.constant 0 : index
      %c0_71 = arith.constant 0 : index
      %c0_72 = arith.constant 0 : index
      %109 = vector.load %arg5[%c0_70, %c0_71, %c0_72] : memref<1x3x128xi32, #tpu.memory_space<vmem>>, vector<1x3x128xi32>
      %110 = vector.shape_cast %109 : vector<1x3x128xi32> to vector<3x128xi32>
      %111 = vector.shape_cast %108 : vector<3x128xi32> to vector<1x3x128xi32>
      tpu.vector_store %arg5[%c0_70, %c0_71, %c0_72], %111 {strides = array<i32>} : memref<1x3x128xi32, #tpu.memory_space<vmem>>, vector<1x3x128xi32>,
    } else {
    }
    %c0_i32_1 = arith.constant 0 : i32
    %3 = vector.broadcast %c0_i32_1 : i32 to vector<1x128xi32>
    %c0 = arith.constant 0 : index
    %c0_2 = arith.constant 0 : index
    %c0_3 = arith.constant 0 : index
    %4 = vector.load %arg3[%c0, %c0_2, %c0_3] : memref<1x2x128xi32, #tpu.memory_space<vmem>>, vector<1x2x128xi32>
    %5 = vector.shape_cast %4 : vector<1x2x128xi32> to vector<2x128xi32>
    %c0_4 = arith.constant 0 : index
    %c0_5 = arith.constant 0 : index
    %c0_6 = arith.constant 0 : index
    %c0_7 = arith.constant 0 : index
    %6 = vector.load %arg2[%c0_4, %c0_5, %c0_6, %c0_7] : memref<1x4x2x128xf32, #tpu.memory_space<vmem>>, vector<1x1x2x128xf32>
    %7 = vector.shape_cast %6 : vector<1x1x2x128xf32> to vector<2x128xf32>
    %c0_i32_8 = arith.constant 0 : i32
    %8 = vector.broadcast %c0_i32_8 : i32 to vector<2x128xi32>
    %c0_9 = arith.constant 0 : index
    %c1 = arith.constant 1 : index
    %c0_10 = arith.constant 0 : index
    %c0_11 = arith.constant 0 : index
    %9 = vector.load %arg2[%c0_9, %c1, %c0_10, %c0_11] : memref<1x4x2x128xf32, #tpu.memory_space<vmem>>, vector<1x1x2x128xf32>
    %10 = vector.shape_cast %9 : vector<1x1x2x128xf32> to vector<2x128xf32>
    %11 = arith.cmpf ogt, %10, %7 : vector<2x128xf32>
    %12 = arith.select %11, %10, %7 : vector<2x128xi1>, vector<2x128xf32>
    %c1_i32 = arith.constant 1 : i32
    %13 = vector.broadcast %c1_i32 : i32 to vector<2x128xi32>
    %14 = arith.select %11, %13, %8 : vector<2x128xi1>, vector<2x128xi32>
    %c0_12 = arith.constant 0 : index
    %c2 = arith.constant 2 : index
    %c0_13 = arith.constant 0 : index
    %c0_14 = arith.constant 0 : index
    %15 = vector.load %arg2[%c0_12, %c2, %c0_13, %c0_14] : memref<1x4x2x128xf32, #tpu.memory_space<vmem>>, vector<1x1x2x128xf32>
    %16 = vector.shape_cast %15 : vector<1x1x2x128xf32> to vector<2x128xf32>
    %17 = arith.cmpf ogt, %16, %12 : vector<2x128xf32>
    %18 = arith.select %17, %16, %12 : vector<2x128xi1>, vector<2x128xf32>
    %c2_i32 = arith.constant 2 : i32
    %19 = vector.broadcast %c2_i32 : i32 to vector<2x128xi32>
    %20 = arith.select %17, %19, %14 : vector<2x128xi1>, vector<2x128xi32>
    %c0_15 = arith.constant 0 : index
    %c3 = arith.constant 3 : index
    %c0_16 = arith.constant 0 : index
    %c0_17 = arith.constant 0 : index
    %21 = vector.load %arg2[%c0_15, %c3, %c0_16, %c0_17] : memref<1x4x2x128xf32, #tpu.memory_space<vmem>>, vector<1x1x2x128xf32>
    %22 = vector.shape_cast %21 : vector<1x1x2x128xf32> to vector<2x128xf32>
    %23 = arith.cmpf ogt, %22, %18 : vector<2x128xf32>
    %c3_i32 = arith.constant 3 : i32
    %24 = vector.broadcast %c3_i32 : i32 to vector<2x128xi32>
    %25 = arith.select %23, %24, %20 : vector<2x128xi1>, vector<2x128xi32>
    %c1_i32_18 = arith.constant 1 : i32
    %26 = vector.broadcast %c1_i32_18 : i32 to vector<2x128xi32>
    %27 = arith.cmpi eq, %25, %26 : vector<2x128xi32>
    %c1_i32_19 = arith.constant 1 : i32
    %28 = vector.broadcast %c1_i32_19 : i32 to vector<2x128xi32>
    %29 = arith.cmpi eq, %5, %28 : vector<2x128xi32>
    %30 = arith.andi %27, %29 : vector<2x128xi1>
    %31 = arith.extui %30 : vector<2x128xi1> to vector<2x128xi32>
    %cst = arith.constant dense<0> : vector<128xi32>
    %32 = vector.multi_reduction <add>, %31, %cst [0] : vector<2x128xi32> to vector<128xi32>
    %33 = vector.shape_cast %32 : vector<128xi32> to vector<1x128xi32>
    %34 = arith.ori %27, %29 : vector<2x128xi1>
    %35 = arith.extui %34 : vector<2x128xi1> to vector<2x128xi32>
    %cst_20 = arith.constant dense<0> : vector<128xi32>
    %36 = vector.multi_reduction <add>, %35, %cst_20 [0] : vector<2x128xi32> to vector<128xi32>
    %37 = vector.shape_cast %36 : vector<128xi32> to vector<1x128xi32>
    %38 = arith.addi %3, %33 : vector<1x128xi32>
    %39 = arith.addi %3, %37 : vector<1x128xi32>
    %c2_i32_21 = arith.constant 2 : i32
    %40 = vector.broadcast %c2_i32_21 : i32 to vector<2x128xi32>
    %41 = arith.cmpi eq, %25, %40 : vector<2x128xi32>
    %c2_i32_22 = arith.constant 2 : i32
    %42 = vector.broadcast %c2_i32_22 : i32 to vector<2x128xi32>
    %43 = arith.cmpi eq, %5, %42 : vector<2x128xi32>
    %44 = arith.andi %41, %43 : vector<2x128xi1>
    %45 = arith.extui %44 : vector<2x128xi1> to vector<2x128xi32>
    %cst_23 = arith.constant dense<0> : vector<128xi32>
    %46 = vector.multi_reduction <add>, %45, %cst_23 [0] : vector<2x128xi32> to vector<128xi32>
    %47 = vector.shape_cast %46 : vector<128xi32> to vector<1x128xi32>
    %48 = arith.ori %41, %43 : vector<2x128xi1>
    %49 = arith.extui %48 : vector<2x128xi1> to vector<2x128xi32>
    %cst_24 = arith.constant dense<0> : vector<128xi32>
    %50 = vector.multi_reduction <add>, %49, %cst_24 [0] : vector<2x128xi32> to vector<128xi32>
    %51 = vector.shape_cast %50 : vector<128xi32> to vector<1x128xi32>
    %52 = arith.addi %3, %47 : vector<1x128xi32>
    %53 = arith.addi %3, %51 : vector<1x128xi32>
    %c3_i32_25 = arith.constant 3 : i32
    %54 = vector.broadcast %c3_i32_25 : i32 to vector<2x128xi32>
    %55 = arith.cmpi eq, %25, %54 : vector<2x128xi32>
    %c3_i32_26 = arith.constant 3 : i32
    %56 = vector.broadcast %c3_i32_26 : i32 to vector<2x128xi32>
    %57 = arith.cmpi eq, %5, %56 : vector<2x128xi32>
    %58 = arith.andi %55, %57 : vector<2x128xi1>
    %59 = arith.extui %58 : vector<2x128xi1> to vector<2x128xi32>
    %cst_27 = arith.constant dense<0> : vector<128xi32>
    %60 = vector.multi_reduction <add>, %59, %cst_27 [0] : vector<2x128xi32> to vector<128xi32>
    %61 = vector.shape_cast %60 : vector<128xi32> to vector<1x128xi32>
    %62 = arith.ori %55, %57 : vector<2x128xi1>
    %63 = arith.extui %62 : vector<2x128xi1> to vector<2x128xi32>
    %cst_28 = arith.constant dense<0> : vector<128xi32>
    %64 = vector.multi_reduction <add>, %63, %cst_28 [0] : vector<2x128xi32> to vector<128xi32>
    %65 = vector.shape_cast %64 : vector<128xi32> to vector<1x128xi32>
    %66 = arith.addi %3, %61 : vector<1x128xi32>
    %67 = arith.addi %3, %65 : vector<1x128xi32>
    %c0_29 = arith.constant 0 : index
    %c0_30 = arith.constant 0 : index
    %c0_31 = arith.constant 0 : index
    %68 = vector.load %arg4[%c0_29, %c0_30, %c0_31] : memref<1x3x128xi32, #tpu.memory_space<vmem>>, vector<1x1x128xi32>
    %69 = vector.shape_cast %68 : vector<1x1x128xi32> to vector<1x128xi32>
    %70 = arith.addi %69, %38 : vector<1x128xi32>
    %c0_32 = arith.constant 0 : index
    %c0_33 = arith.constant 0 : index
    %c0_34 = arith.constant 0 : index
    %71 = vector.load %arg4[%c0_32, %c0_33, %c0_34] : memref<1x3x128xi32, #tpu.memory_space<vmem>>, vector<1x1x128xi32>
    %72 = vector.shape_cast %71 : vector<1x1x128xi32> to vector<1x128xi32>
    %73 = vector.shape_cast %70 : vector<1x128xi32> to vector<1x1x128xi32>
    tpu.vector_store %arg4[%c0_32, %c0_33, %c0_34], %73 {strides = array<i32>} : memref<1x3x128xi32, #tpu.memory_space<vmem>>, vector<1x1x128xi32>,
    %c0_35 = arith.constant 0 : index
    %c0_36 = arith.constant 0 : index
    %c0_37 = arith.constant 0 : index
    %74 = vector.load %arg5[%c0_35, %c0_36, %c0_37] : memref<1x3x128xi32, #tpu.memory_space<vmem>>, vector<1x1x128xi32>
    %75 = vector.shape_cast %74 : vector<1x1x128xi32> to vector<1x128xi32>
    %76 = arith.addi %75, %39 : vector<1x128xi32>
    %c0_38 = arith.constant 0 : index
    %c0_39 = arith.constant 0 : index
    %c0_40 = arith.constant 0 : index
    %77 = vector.load %arg5[%c0_38, %c0_39, %c0_40] : memref<1x3x128xi32, #tpu.memory_space<vmem>>, vector<1x1x128xi32>
    %78 = vector.shape_cast %77 : vector<1x1x128xi32> to vector<1x128xi32>
    %79 = vector.shape_cast %76 : vector<1x128xi32> to vector<1x1x128xi32>
    tpu.vector_store %arg5[%c0_38, %c0_39, %c0_40], %79 {strides = array<i32>} : memref<1x3x128xi32, #tpu.memory_space<vmem>>, vector<1x1x128xi32>,
    %c0_41 = arith.constant 0 : index
    %c1_42 = arith.constant 1 : index
    %c0_43 = arith.constant 0 : index
    %80 = vector.load %arg4[%c0_41, %c1_42, %c0_43] : memref<1x3x128xi32, #tpu.memory_space<vmem>>, vector<1x1x128xi32>
    %81 = vector.shape_cast %80 : vector<1x1x128xi32> to vector<1x128xi32>
    %82 = arith.addi %81, %52 : vector<1x128xi32>
    %c0_44 = arith.constant 0 : index
    %c1_45 = arith.constant 1 : index
    %c0_46 = arith.constant 0 : index
    %83 = vector.load %arg4[%c0_44, %c1_45, %c0_46] : memref<1x3x128xi32, #tpu.memory_space<vmem>>, vector<1x1x128xi32>
    %84 = vector.shape_cast %83 : vector<1x1x128xi32> to vector<1x128xi32>
    %85 = vector.shape_cast %82 : vector<1x128xi32> to vector<1x1x128xi32>
    tpu.vector_store %arg4[%c0_44, %c1_45, %c0_46], %85 {strides = array<i32>} : memref<1x3x128xi32, #tpu.memory_space<vmem>>, vector<1x1x128xi32>,
    %c0_47 = arith.constant 0 : index
    %c1_48 = arith.constant 1 : index
    %c0_49 = arith.constant 0 : index
    %86 = vector.load %arg5[%c0_47, %c1_48, %c0_49] : memref<1x3x128xi32, #tpu.memory_space<vmem>>, vector<1x1x128xi32>
    %87 = vector.shape_cast %86 : vector<1x1x128xi32> to vector<1x128xi32>
    %88 = arith.addi %87, %53 : vector<1x128xi32>
    %c0_50 = arith.constant 0 : index
    %c1_51 = arith.constant 1 : index
    %c0_52 = arith.constant 0 : index
    %89 = vector.load %arg5[%c0_50, %c1_51, %c0_52] : memref<1x3x128xi32, #tpu.memory_space<vmem>>, vector<1x1x128xi32>
    %90 = vector.shape_cast %89 : vector<1x1x128xi32> to vector<1x128xi32>
    %91 = vector.shape_cast %88 : vector<1x128xi32> to vector<1x1x128xi32>
    tpu.vector_store %arg5[%c0_50, %c1_51, %c0_52], %91 {strides = array<i32>} : memref<1x3x128xi32, #tpu.memory_space<vmem>>, vector<1x1x128xi32>,
    %c0_53 = arith.constant 0 : index
    %c2_54 = arith.constant 2 : index
    %c0_55 = arith.constant 0 : index
    %92 = vector.load %arg4[%c0_53, %c2_54, %c0_55] : memref<1x3x128xi32, #tpu.memory_space<vmem>>, vector<1x1x128xi32>
    %93 = vector.shape_cast %92 : vector<1x1x128xi32> to vector<1x128xi32>
    %94 = arith.addi %93, %66 : vector<1x128xi32>
    %c0_56 = arith.constant 0 : index
    %c2_57 = arith.constant 2 : index
    %c0_58 = arith.constant 0 : index
    %95 = vector.load %arg4[%c0_56, %c2_57, %c0_58] : memref<1x3x128xi32, #tpu.memory_space<vmem>>, vector<1x1x128xi32>
    %96 = vector.shape_cast %95 : vector<1x1x128xi32> to vector<1x128xi32>
    %97 = vector.shape_cast %94 : vector<1x128xi32> to vector<1x1x128xi32>
    tpu.vector_store %arg4[%c0_56, %c2_57, %c0_58], %97 {strides = array<i32>} : memref<1x3x128xi32, #tpu.memory_space<vmem>>, vector<1x1x128xi32>,
    %c0_59 = arith.constant 0 : index
    %c2_60 = arith.constant 2 : index
    %c0_61 = arith.constant 0 : index
    %98 = vector.load %arg5[%c0_59, %c2_60, %c0_61] : memref<1x3x128xi32, #tpu.memory_space<vmem>>, vector<1x1x128xi32>
    %99 = vector.shape_cast %98 : vector<1x1x128xi32> to vector<1x128xi32>
    %100 = arith.addi %99, %67 : vector<1x128xi32>
    %c0_62 = arith.constant 0 : index
    %c2_63 = arith.constant 2 : index
    %c0_64 = arith.constant 0 : index
    %101 = vector.load %arg5[%c0_62, %c2_63, %c0_64] : memref<1x3x128xi32, #tpu.memory_space<vmem>>, vector<1x1x128xi32>
    %102 = vector.shape_cast %101 : vector<1x1x128xi32> to vector<1x128xi32>
    %103 = vector.shape_cast %100 : vector<1x128xi32> to vector<1x1x128xi32>
    tpu.vector_store %arg5[%c0_62, %c2_63, %c0_64], %103 {strides = array<i32>} : memref<1x3x128xi32, #tpu.memory_space<vmem>>, vector<1x1x128xi32>,
    return
  }
  func.func @transform_0(%arg0: i32, %arg1: i32) -> (i32, i32, i32, i32) {
    %c0_i32 = arith.constant 0 : i32
    %c0_i32_0 = arith.constant 0 : i32
    %c0_i32_1 = arith.constant 0 : i32
    return %arg0, %c0_i32, %arg1, %c0_i32_0 : i32, i32, i32, i32
  }
  func.func @transform_1(%arg0: i32, %arg1: i32) -> (i32, i32, i32) {
    %c0_i32 = arith.constant 0 : i32
    %c0_i32_0 = arith.constant 0 : i32
    return %arg0, %arg1, %c0_i32 : i32, i32, i32
  }
  func.func @transform_2(%arg0: i32, %arg1: i32) -> (i32, i32, i32) {
    %c0_i32 = arith.constant 0 : i32
    %c0_i32_0 = arith.constant 0 : i32
    %c0_i32_1 = arith.constant 0 : i32
    return %arg0, %c0_i32, %c0_i32_0 : i32, i32, i32
  }
  func.func @transform_3(%arg0: i32, %arg1: i32) -> (i32, i32, i32) {
    %c0_i32 = arith.constant 0 : i32
    %c0_i32_0 = arith.constant 0 : i32
    %c0_i32_1 = arith.constant 0 : i32
    return %arg0, %c0_i32, %c0_i32_0 : i32, i32, i32
  }
}

</mosaic_0001>

<llo_original>
// kernel: tpu_custom_call.1
$region0: #{tpu_custom_call.1}
  #allocation0 [shape = 'u32[]', space=smem, size = 0x4, offset = 0x4, fixed_abs, tag = 'smem constant byte address 0x4 - core index']
  #allocation1 [shape = 'u32[144,128]{1,0:T(1,128)}', space=vmem, size = 0x12000, scoped, tag = 'internal scratch']
  %s0 = inlined_call_operand.hbm [shape: f32[2,4,2,128], index: 0, kind: input, shape index: {}]
  %s1 = inlined_call_operand.hbm [shape: s32[2,2,128], index: 1, kind: input, shape index: {}]
  %s2 = inlined_call_operand.vmem [shape: s32[2,3,128], index: 2, kind: output, shape index: {0}]
  %s3 = inlined_call_operand.vmem [shape: s32[2,3,128], index: 3, kind: output, shape index: {1}]
  %4 = xla_tuple %s2, %s3
  %s5 = sld [smem:[#allocation0]]
  $region61: #{tpu_custom_call.1} parent=0
    _
  %s7 = ssub.s32 1, %s5
  %s8 = scalar_select 0, %s7, %s5
  $region1: #{tpu_custom_call.1} parent=0
    #allocation2 [shape = 'u8[8192]{0}', space=vmem, size = 0x2000, scoped, tag = 'input window, operand 0']
    #allocation3 [shape = 's32[2]{0}', space=sflag, size = 0x8, scoped, tag = 'scoped memory for tpu_custom_call.1']
    #allocation4 [shape = 'u8[2048]{0}', space=vmem, size = 0x800, scoped, tag = 'input window, operand 1']
    #allocation5 [shape = 's32[2]{0}', space=sflag, size = 0x8, scoped, tag = 'scoped memory for tpu_custom_call.1']
    %9 = vsyncpa [#allocation3], 0
    %s10 = scalar_lea.sflag [#allocation3], 1
    %11 = vsyncpa %s10, 0
    %12 = vsyncpa [#allocation5], 0
    %s13 = scalar_lea.sflag [#allocation5], 1
    %14 = vsyncpa %s13, 0
    loop: start=0, step=1, limit=4
    $region2: #{tpu_custom_call.1} parent=1 // loop_pre_header
      _
    $region3: #{tpu_custom_call.1} parent=1 // loop_header
      %s16 = sphi 0, %s20
      %p17 = scmp.ge.s32.totalorder %s16, 4
      %s23 = sphi 0, %s35
      %s24 = sphi 0, %s31
      %s25 = sphi 0, %s23
      %s26 = sphi 0, %s24
      %s27 = sphi 0, %s25
      %s28 = sphi 0, %s26
      %s40 = sphi 0, %s42
      %s43 = sphi 0, %s40
      %s44 = sphi 0, %s43
      %s60 = sphi 0, %s44
      %s68 = sphi 0, %s70
      %s71 = sphi 0, %s68
      %s72 = sphi 0, %s71
      %s88 = sphi 0, %s72
      %s94 = sphi 0, %s96
      %s97 = sphi 0, %s94
      %s98 = sphi 0, %s97
      %s114 = sphi 0, %s98
      %s120 = sphi 0, %s122
      %s123 = sphi 0, %s120
      %s124 = sphi 0, %s123
      %s140 = sphi 0, %s124
    $region4: #{tpu_custom_call.1} parent=1 // loop_header_branch
      %19 = sbr.rel (%p17) target = $region8
    $region5: #{tpu_custom_call.1} parent=1 // loop_body
      %s21 = ssub.s32 %s16, 1
      %s22 = ssub.s32 %s16, 2
      %s29 = sadd.s32 1, %s24
      %p30 = scmp.ge.s32.totalorder %s29, 1
      %s31 = scalar_select %p30, 0, %s29
      %s32 = sadd.s32 1, %s23
      %s33 = scalar_select %p30, %s32, %s23
      %p34 = scmp.ge.s32.totalorder %s33, 2
      %s35 = scalar_select %p34, 0, %s33
      %s36 = ssub.s32 %s23, %s35
      %s37 = ssub.s32 %s24, %s31
      %s38 = sor.u32 %s36, %s37
      %p39 = scmp.eq.s32.totalorder %s38, 0
      %s41 = sadd.s32 %s40, 1
      %s42 = scalar_select %p39, %s40, %s41
      %p45 = pneg %p39
      %p46 = scmp.eq.s32.totalorder %s16, 1
      %p47 = por %p45, %p46
      %p48 = scmp.ne.s32.totalorder %s40, %s43
      %p49 = scmp.eq.s32.totalorder %s16, 0
      %p50 = por %p48, %p49
      %p51 = scmp.ne.s32.totalorder %s40, %s43
      %p52 = scmp.eq.s32.totalorder %s21, 1
      %p53 = por %p51, %p52
      %p54 = scmp.ne.s32.totalorder %s43, %s44
      %p55 = scmp.eq.s32.totalorder %s21, 0
      %p56 = por %p54, %p55
      %p57 = scmp.ne.s32.totalorder %s43, %s44
      %p58 = scmp.eq.s32.totalorder %s22, 1
      %p59 = por %p57, %p58
      %p61 = scmp.ne.s32.totalorder %s44, %s60
      %p62 = scmp.eq.s32.totalorder %s22, 0
      %p63 = por %p61, %p62
      %s64 = ssub.s32 %s23, %s35
      %s65 = ssub.s32 %s24, %s31
      %s66 = sor.u32 %s64, %s65
      %p67 = scmp.eq.s32.totalorder %s66, 0
      %s69 = sadd.s32 %s68, 1
      %s70 = scalar_select %p67, %s68, %s69
      %p73 = pneg %p67
      %p74 = scmp.eq.s32.totalorder %s16, 1
      %p75 = por %p73, %p74
      %p76 = scmp.ne.s32.totalorder %s68, %s71
      %p77 = scmp.eq.s32.totalorder %s16, 0
      %p78 = por %p76, %p77
      %p79 = scmp.ne.s32.totalorder %s68, %s71
      %p80 = scmp.eq.s32.totalorder %s21, 1
      %p81 = por %p79, %p80
      %p82 = scmp.ne.s32.totalorder %s71, %s72
      %p83 = scmp.eq.s32.totalorder %s21, 0
      %p84 = por %p82, %p83
      %p85 = scmp.ne.s32.totalorder %s71, %s72
      %p86 = scmp.eq.s32.totalorder %s22, 1
      %p87 = por %p85, %p86
      %p89 = scmp.ne.s32.totalorder %s72, %s88
      %p90 = scmp.eq.s32.totalorder %s22, 0
      %p91 = por %p89, %p90
      %s92 = ssub.s32 %s23, %s35
      %p93 = scmp.eq.s32.totalorder %s92, 0
      %s95 = sadd.s32 %s94, 1
      %s96 = scalar_select %p93, %s94, %s95
      %p99 = pneg %p93
      %p100 = scmp.eq.s32.totalorder %s16, 1
      %p101 = por %p99, %p100
      %p102 = scmp.ne.s32.totalorder %s94, %s97
      %p103 = scmp.eq.s32.totalorder %s16, 0
      %p104 = por %p102, %p103
      %p105 = scmp.ne.s32.totalorder %s94, %s97
      %p106 = scmp.eq.s32.totalorder %s21, 1
      %p107 = por %p105, %p106
      %p108 = scmp.ne.s32.totalorder %s97, %s98
      %p109 = scmp.eq.s32.totalorder %s21, 0
      %p110 = por %p108, %p109
      %p111 = scmp.ne.s32.totalorder %s97, %s98
      %p112 = scmp.eq.s32.totalorder %s22, 1
      %p113 = por %p111, %p112
      %p115 = scmp.ne.s32.totalorder %s98, %s114
      %p116 = scmp.eq.s32.totalorder %s22, 0
      %p117 = por %p115, %p116
      %s118 = ssub.s32 %s23, %s35
      %p119 = scmp.eq.s32.totalorder %s118, 0
      %s121 = sadd.s32 %s120, 1
      %s122 = scalar_select %p119, %s120, %s121
      %p125 = pneg %p119
      %p126 = scmp.eq.s32.totalorder %s16, 1
      %p127 = por %p125, %p126
      %p128 = scmp.ne.s32.totalorder %s120, %s123
      %p129 = scmp.eq.s32.totalorder %s16, 0
      %p130 = por %p128, %p129
      %p131 = scmp.ne.s32.totalorder %s120, %s123
      %p132 = scmp.eq.s32.totalorder %s21, 1
      %p133 = por %p131, %p132
      %p134 = scmp.ne.s32.totalorder %s123, %s124
      %p135 = scmp.eq.s32.totalorder %s21, 0
      %p136 = por %p134, %p135
      %p137 = scmp.ne.s32.totalorder %s123, %s124
      %p138 = scmp.eq.s32.totalorder %s22, 1
      %p139 = por %p137, %p138
      %p141 = scmp.ne.s32.totalorder %s124, %s140
      %p142 = scmp.eq.s32.totalorder %s22, 0
      %p143 = por %p141, %p142
      %p144 = scmp.le.s32.totalorder 1, %s16
      %p145 = scmp.lt.s32.totalorder %s16, 3
      %p146 = pnand %p144, %p145
      %p147 = pneg %p146
      // Predicated region
      $region9: #{tpu_custom_call.1} parent=5 // pred_check
        _
      $region10: #{tpu_custom_call.1} parent=5 // pred_check_branch
        %149 = sbr.rel (%p146) target = $region12
      $region11: #{tpu_custom_call.1} parent=5 // pred_region
        %s150 = ssub.s32 %s16, 1
      $region12: #{tpu_custom_call.1} parent=5 // pred_fallthru
        _
      %p151 = scmp.lt.s32.totalorder %s16, 2
      // Predicated region
      $region13: #{tpu_custom_call.1} parent=5 // pred_check
        %p152 = pneg %p151
      $region14: #{tpu_custom_call.1} parent=5 // pred_check_branch
        %154 = sbr.rel (%p152) target = $region16
      $region15: #{tpu_custom_call.1} parent=5 // pred_region
        // Predicated region
        $region17: #{tpu_custom_call.1} parent=15 // pred_check
          %p155 = pneg %p50
        $region18: #{tpu_custom_call.1} parent=15 // pred_check_branch
          %157 = sbr.rel (%p155) target = $region20
        $region19: #{tpu_custom_call.1} parent=15 // pred_region
          %s158 = sand.u32 %s40, 1
          %s159 = scalar_lea.sflag [#allocation3], %s158
          %s160 = sand.u32 %s40, 1
          %s161 = smul.addr %s160, 8
          %s162 = scalar_lea.vmem [#allocation2], %s161
          %s164 = ssub.s32 128, 128
          %165 = vsyncadd %s159, %s164
          %s166 = smul.addr %s23, 4
          %s167 = sadd.s32 %s24, %s166
          %s168 = smul.addr %s167, 32
          %s169 = scalar_lea.hbm %s0, %s168
          %s170 = sshll.u32 %s162, 4
          %s171 = int_to_ptr.vmem [resolvable:$true] %s170
          %176 = dma.hbm_to_vmem [thread:$0]  %s169, 128, %s171, %s159, 32, 32, 2
        $region20: #{tpu_custom_call.1} parent=15 // pred_fallthru
          _
        // Predicated region
        $region21: #{tpu_custom_call.1} parent=15 // pred_check
          %p177 = pneg %p78
        $region22: #{tpu_custom_call.1} parent=15 // pred_check_branch
          %179 = sbr.rel (%p177) target = $region24
        $region23: #{tpu_custom_call.1} parent=15 // pred_region
          %s180 = sand.u32 %s68, 1
          %s181 = scalar_lea.sflag [#allocation5], %s180
          %s182 = sand.u32 %s68, 1
          %s183 = smul.addr %s182, 2
          %s184 = scalar_lea.vmem [#allocation4], %s183
          %s186 = ssub.s32 32, 32
          %187 = vsyncadd %s181, %s186
          %s188 = sadd.s32 %s24, %s23
          %s189 = smul.addr %s188, 32
          %s190 = scalar_lea.hbm %s1, %s189
          %s192 = sshll.u32 %s184, 4
          %s193 = int_to_ptr.vmem [resolvable:$true] %s192
          %195 = dma.hbm_to_vmem [thread:$0]  %s190, 32, %s193, %s181
        $region24: #{tpu_custom_call.1} parent=15 // pred_fallthru
          _
      $region16: #{tpu_custom_call.1} parent=5 // pred_fallthru
        _
      %p196 = scmp.le.s32.totalorder 1, %s16
      %p197 = scmp.lt.s32.totalorder %s16, 3
      %p198 = pnand %p196, %p197
      %p199 = pneg %p198
      // Predicated region
      $region25: #{tpu_custom_call.1} parent=5 // pred_check
        _
      $region26: #{tpu_custom_call.1} parent=5 // pred_check_branch
        %201 = sbr.rel (%p198) target = $region28
      $region27: #{tpu_custom_call.1} parent=5 // pred_region
        %s202 = ssub.s32 %s16, 1
        %s203 = sand.u32 %s43, 1
        %s204 = scalar_lea.sflag [#allocation3], %s203
        %s205 = sand.u32 %s43, 1
        %s206 = smul.addr %s205, 8
        %s207 = scalar_lea.vmem [#allocation2], %s206
        // Predicated region
        $region29: #{tpu_custom_call.1} parent=27 // pred_check
          %p208 = pneg %p56
        $region30: #{tpu_custom_call.1} parent=27 // pred_check_branch
          %210 = sbr.rel (%p208) target = $region32
        $region31: #{tpu_custom_call.1} parent=27 // pred_region
          %211 = dma.done %s204, 128
        $region32: #{tpu_custom_call.1} parent=27 // pred_fallthru
          _
        %s212 = sand.u32 %s71, 1
        %s213 = scalar_lea.sflag [#allocation5], %s212
        %s214 = sand.u32 %s71, 1
        %s215 = smul.addr %s214, 2
        %s216 = scalar_lea.vmem [#allocation4], %s215
        // Predicated region
        $region33: #{tpu_custom_call.1} parent=27 // pred_check
          %p217 = pneg %p84
        $region34: #{tpu_custom_call.1} parent=27 // pred_check_branch
          %219 = sbr.rel (%p217) target = $region36
        $region35: #{tpu_custom_call.1} parent=27 // pred_region
          %220 = dma.done %s213, 32
        $region36: #{tpu_custom_call.1} parent=27 // pred_fallthru
          _
        %s221 = sand.u32 %s43, 1
        %s222 = scalar_lea.sflag [#allocation3], %s221
        %s223 = sand.u32 %s43, 1
        %s224 = smul.addr %s223, 8
        %s225 = scalar_lea.vmem [#allocation2], %s224
        %p226 = pneg %p56
        %p227 = pneg %p53
        %s228 = sand.u32 %s71, 1
        %s229 = scalar_lea.sflag [#allocation5], %s228
        %s230 = sand.u32 %s71, 1
        %s231 = smul.addr %s230, 2
        %s232 = scalar_lea.vmem [#allocation4], %s231
        %p233 = pneg %p84
        %p234 = pneg %p81
        %p235 = pneg %p110
        %p236 = pneg %p107
        %p237 = scmp.lt.s32.totalorder %s25, 1
        %s238 = scalar_select %p237, %s25, 1
        %s239 = smul.addr %s238, 4
        %s240 = scalar_lea.vmem %s2, %s239
        %p241 = pneg %p136
        %p242 = pneg %p133
        %p243 = scmp.lt.s32.totalorder %s25, 1
        %s244 = scalar_select %p243, %s25, 1
        %s245 = smul.addr %s244, 4
        %s246 = scalar_lea.vmem %s3, %s245
        %p247 = scmp.lt.s32.totalorder %s25, 1
        %s248 = scalar_select %p247, %s25, 1
        %s249 = smul.addr %s248, 4
        %s250 = scalar_lea.vmem %s2, %s249
        %p251 = scmp.lt.s32.totalorder %s25, 1
        %s252 = scalar_select %p251, %s25, 1
        %s253 = smul.addr %s252, 4
        %s254 = scalar_lea.vmem %s3, %s253
        %p255 = scmp.eq.s32.totalorder %s26, 0
        // Predicated region
        $region37: #{tpu_custom_call.1} parent=27 // pred_check
          %p256 = pneg %p255
        $region38: #{tpu_custom_call.1} parent=27 // pred_check_branch
          %258 = sbr.rel (%p256) target = $region40
        $region39: #{tpu_custom_call.1} parent=27 // pred_region
          %259 = vst [vmem:[%s250] sm:$0x7] 0
          %260 = vst [vmem:[%s254] sm:$0x7] 0
        $region40: #{tpu_custom_call.1} parent=27 // pred_fallthru
          _
        %v261 = vld [vmem:[%s216] sm:$0x3]
        %v262 = vld [vmem:[%s207] sm:$0x3]
        %s263 = scalar_lea.vmem %s207, 2 [#allocation2]
        %v264 = vld [vmem:[%s263] sm:$0x3]
        %vm265 = vcmp.gt.f32.partialorder %v264, %v262
        %v266 = vsel %vm265, %v264, %v262
        %v267 = vsel %vm265, 1, 0
        %s268 = scalar_lea.vmem %s207, 4 [#allocation2]
        %v269 = vld [vmem:[%s268] sm:$0x3]
        %vm270 = vcmp.gt.f32.partialorder %v269, %v266
        %v271 = vsel %vm270, %v269, %v266
        %v272 = vsel %vm270, 2, %v267
        %s273 = scalar_lea.vmem %s207, 6 [#allocation2]
        %v274 = vld [vmem:[%s273] sm:$0x3]
        %vm275 = vcmp.gt.f32.partialorder %v274, %v271
        %v276 = vsel %vm275, 3, %v272
        %vm277 = vcmp.eq.s32.totalorder %v276, 1
        %vm278 = vcmp.eq.s32.totalorder %v261, 1
        %vm279 = vmand %vm277, %vm278
        %v280 = vsel %vm279, 1, 0
        %vm281 = vcmask 1041408
        %v282 = vsel %vm281, %v280, 0
        %v283 = vrot.slane %v282, 4
        %v284 = vadd.s32 %v282, %v283
        %v285 = vrot.slane %v284, 2
        %v286 = vadd.s32 %v284, %v285
        %v287 = vrot.slane %v286, 1
        %v288 = vadd.s32 %v286, %v287
        %vm289 = vmor %vm277, %vm278
        %v290 = vsel %vm289, 1, 0
        %v291 = vsel %vm281, %v290, 0
        %v292 = vrot.slane %v291, 4
        %v293 = vadd.s32 %v291, %v292
        %v294 = vrot.slane %v293, 2
        %v295 = vadd.s32 %v293, %v294
        %v296 = vrot.slane %v295, 1
        %v297 = vadd.s32 %v295, %v296
        %vm298 = vcmp.eq.s32.totalorder %v276, 2
        %vm299 = vcmp.eq.s32.totalorder %v261, 2
        %vm300 = vmand %vm298, %vm299
        %v301 = vsel %vm300, 1, 0
        %v302 = vsel %vm281, %v301, 0
        %v303 = vrot.slane %v302, 4
        %v304 = vadd.s32 %v302, %v303
        %v305 = vrot.slane %v304, 2
        %v306 = vadd.s32 %v304, %v305
        %v307 = vrot.slane %v306, 1
        %v308 = vadd.s32 %v306, %v307
        %vm309 = vmor %vm298, %vm299
        %v310 = vsel %vm309, 1, 0
        %v311 = vsel %vm281, %v310, 0
        %v312 = vrot.slane %v311, 4
        %v313 = vadd.s32 %v311, %v312
        %v314 = vrot.slane %v313, 2
        %v315 = vadd.s32 %v313, %v314
        %v316 = vrot.slane %v315, 1
        %v317 = vadd.s32 %v315, %v316
        %vm318 = vcmp.eq.s32.totalorder %v276, 3
        %vm319 = vcmp.eq.s32.totalorder %v261, 3
        %vm320 = vmand %vm318, %vm319
        %v321 = vsel %vm320, 1, 0
        %v322 = vsel %vm281, %v321, 0
        %v323 = vrot.slane %v322, 4
        %v324 = vadd.s32 %v322, %v323
        %v325 = vrot.slane %v324, 2
        %v326 = vadd.s32 %v324, %v325
        %v327 = vrot.slane %v326, 1
        %v328 = vadd.s32 %v326, %v327
        %vm329 = vmor %vm318, %vm319
        %v330 = vsel %vm329, 1, 0
        %v331 = vsel %vm281, %v330, 0
        %v332 = vrot.slane %v331, 4
        %v333 = vadd.s32 %v331, %v332
        %v334 = vrot.slane %v333, 2
        %v335 = vadd.s32 %v333, %v334
        %v336 = vrot.slane %v335, 1
        %v337 = vadd.s32 %v335, %v336
        %v338 = vld [vmem:[%s250] sm:$0x1]
        %v339 = vadd.s32 %v338, %v288
        %340 = vst [vmem:[%s250] sm:$0x1] %v339
        %v341 = vld [vmem:[%s254] sm:$0x1]
        %v342 = vadd.s32 %v341, %v297
        %343 = vst [vmem:[%s254] sm:$0x1] %v342
        %v344 = vld [vmem:[%s250 + $0x1] sm:$0x1]
        %v345 = vadd.s32 %v344, %v308
        %346 = vst [vmem:[%s250 + $0x1] sm:$0x1] %v345
        %v347 = vld [vmem:[%s254 + $0x1] sm:$0x1]
        %v348 = vadd.s32 %v347, %v317
        %349 = vst [vmem:[%s254 + $0x1] sm:$0x1] %v348
        %v350 = vld [vmem:[%s250 + $0x2] sm:$0x1]
        %v351 = vadd.s32 %v350, %v328
        %352 = vst [vmem:[%s250 + $0x2] sm:$0x1] %v351
        %v353 = vld [vmem:[%s254 + $0x2] sm:$0x1]
        %v354 = vadd.s32 %v353, %v337
        %355 = vst [vmem:[%s254 + $0x2] sm:$0x1] %v354
        %p356 = scmp.lt.s32.totalorder %s25, 1
        %s357 = scalar_select %p356, %s25, 1
        %s358 = smul.addr %s357, 4
        %s359 = scalar_lea.vmem %s2, %s358
        %p360 = scmp.lt.s32.totalorder %s25, 1
        %s361 = scalar_select %p360, %s25, 1
        %s362 = smul.addr %s361, 4
        %s363 = scalar_lea.vmem %s3, %s362
        // Predicated region
        $region41: #{tpu_custom_call.1} parent=27 // pred_check
          %p364 = pneg %p107
        $region42: #{tpu_custom_call.1} parent=27 // pred_check_branch
          %366 = sbr.rel (%p364) target = $region44
        $region43: #{tpu_custom_call.1} parent=27 // pred_region
          _
        $region44: #{tpu_custom_call.1} parent=27 // pred_fallthru
          _
        // Predicated region
        $region45: #{tpu_custom_call.1} parent=27 // pred_check
          %p367 = pneg %p133
        $region46: #{tpu_custom_call.1} parent=27 // pred_check_branch
          %369 = sbr.rel (%p367) target = $region48
        $region47: #{tpu_custom_call.1} parent=27 // pred_region
          _
        $region48: #{tpu_custom_call.1} parent=27 // pred_fallthru
          _
      $region28: #{tpu_custom_call.1} parent=5 // pred_fallthru
        _
      %p370 = scmp.le.s32.totalorder 2, %s16
      // Predicated region
      $region49: #{tpu_custom_call.1} parent=5 // pred_check
        %p371 = pneg %p370
      $region50: #{tpu_custom_call.1} parent=5 // pred_check_branch
        %373 = sbr.rel (%p371) target = $region52
      $region51: #{tpu_custom_call.1} parent=5 // pred_region
        %s374 = ssub.s32 %s16, 2
        // Predicated region
        $region53: #{tpu_custom_call.1} parent=51 // pred_check
          %p375 = pneg %p113
        $region54: #{tpu_custom_call.1} parent=51 // pred_check_branch
          %377 = sbr.rel (%p375) target = $region56
        $region55: #{tpu_custom_call.1} parent=51 // pred_region
          %p378 = scmp.lt.s32.totalorder %s27, 1
          %s379 = scalar_select %p378, %s27, 1
          %s380 = smul.addr %s379, 4
          %s381 = scalar_lea.vmem %s2, %s380
        $region56: #{tpu_custom_call.1} parent=51 // pred_fallthru
          _
        // Predicated region
        $region57: #{tpu_custom_call.1} parent=51 // pred_check
          %p382 = pneg %p139
        $region58: #{tpu_custom_call.1} parent=51 // pred_check_branch
          %384 = sbr.rel (%p382) target = $region60
        $region59: #{tpu_custom_call.1} parent=51 // pred_region
          %p385 = scmp.lt.s32.totalorder %s27, 1
          %s386 = scalar_select %p385, %s27, 1
          %s387 = smul.addr %s386, 4
          %s388 = scalar_lea.vmem %s3, %s387
        $region60: #{tpu_custom_call.1} parent=51 // pred_fallthru
          _
      $region52: #{tpu_custom_call.1} parent=5 // pred_fallthru
        _
    $region6: #{tpu_custom_call.1} parent=1 // loop_footer
      %s20 = sadd.s32 1, %s16
    $region7: #{tpu_custom_call.1} parent=1 // loop_footer_branch
      %15 = sbr.rel target = $region3
    $region8: #{tpu_custom_call.1} parent=1 // loop_exit
      _
    %389 = vsyncpa [#allocation3], 1
    %s390 = scalar_lea.sflag [#allocation3], 1
    %391 = vsyncpa %s390, 1
    %392 = vsyncpa [#allocation5], 1
    %s393 = scalar_lea.sflag [#allocation5], 1
    %394 = vsyncpa %s393, 1

</llo_original>
